<compile_context>
chip_gen: v6e
topology: v6e:2x2x1
jax: 0.10.0
libtpu: 0.0.40
codegen_flags: <defaults>
</compile_context>

<pallas_src>
import jax
import jax.numpy as jnp
from jax.experimental import pallas as pl
from jax.experimental.pallas import tpu as pltpu


def _round_up(x, m):
    return (x + m - 1) // m * m


# ----------------------------------------------------------------------------
# Pallas kernel: tiled  x @ W  ->  * beta/2 + h  ->  * x  (per-lane partials)
#   grid = (batch_tiles, N_tiles, K_tiles); K last (reduction axis).
#   x_ref : (nblk, tb, td) resident row-slab (compute dtype, e.g. bf16)
#   w_ref : (td, td)       W tile at block (k, n) (compute dtype)
#   h_ref : (1, td)        f32 field tile at block n
#   o_ref : (tb, td)       f32 output tile at block (b, n); doubles as the
#                          matmul-over-K accumulator (resident across K).
# ----------------------------------------------------------------------------
def _potts_kernel(beta_ref, x_ref, w_ref, h_ref, o_ref):
    n = pl.program_id(1)
    k = pl.program_id(2)
    nk = pl.num_programs(2)

    # New (b, n) output tile: zero the resident f32 accumulator.
    @pl.when(k == 0)
    def _():
        o_ref[...] = jnp.zeros_like(o_ref)

    # Inner loop: pure MXU accumulation (bf16 operands, f32 accumulate).
    o_ref[...] += jnp.dot(x_ref[k], w_ref[...],
                          preferred_element_type=jnp.float32)

    # Epilogue once per (b, n) tile:  x_n * (y * beta/2 + h), in place.
    @pl.when(k == nk - 1)
    def _():
        half_beta = beta_ref[0] * 0.5
        x_n = x_ref[n].astype(jnp.float32)
        o_ref[...] = x_n * (o_ref[...] * half_beta + h_ref[...])


# ----------------------------------------------------------------------------
# One-time parameter preparation (hoisted out of the per-call hot path).
# ----------------------------------------------------------------------------
def prepare_potts_params(w_eff, h, *, td=1024, w_is_symmetric=True,
                         compute_dtype=jnp.bfloat16):
    """Pad + cast the (static) Potts parameters once.

    w_eff: (D, D) effective nn.Linear weight (after Symmetric parametrization).
    h    : (D,)   field parameter.
    td   : D-axis tile (clamped to round_up(D,128)).  1024 is a good default on
           all generations; td=2048 is viable on v5e/v6e's 128 MiB VMEM with a
           raised vmem_limit_bytes, but keep td<=1024 (f32) / 2048 (bf16) on
           v7x's 64 MiB VMEM.
    w_is_symmetric: nn.Linear computes x @ W.T; the kernel contracts against W's
           rows.  The Symmetric parametrization makes that transpose a no-op; a
           raw (non-symmetric) weight is transposed here, once.
    """
    D = h.shape[0]
    assert w_eff.shape == (D, D)
    if not w_is_symmetric:
        w_eff = w_eff.T

    td = min(int(td), _round_up(D, 128))
    assert td % 128 == 0
    d_pad = _round_up(D, td)

    # Zero padding is exact: padded rows/cols of W never meet nonzero x.
    w_p = jnp.pad(w_eff.astype(jnp.float32),
                  ((0, d_pad - D), (0, d_pad - D))).astype(compute_dtype)
    h_p = jnp.pad(h.astype(jnp.float32).reshape(1, D),
                  ((0, 0), (0, d_pad - D)))
    return dict(w=w_p, h=h_p, D=D, td=td, d_pad=d_pad,
                compute_dtype=compute_dtype)


# ----------------------------------------------------------------------------
# Forward pass
# ----------------------------------------------------------------------------
def potts_energy(x_flat, params, beta=1.0, *, tb=256, vmem_limit_bytes=None):
    """Potts energy: sum_j x_j * ((x @ W_eff.T)_j * beta/2 + h_j).

    x_flat: (B, D) (== torch.flatten(X, 1, 2)); params from prepare_potts_params.
    tb: batch rows contracted per streamed W pass.  Larger tb raises arithmetic
        intensity linearly (tb/2 flops per W byte); 256 fits default scoped VMEM
        on v5e/v6e/v7x at td=1024 bf16, use 512 for large B if VMEM allows.
    """
    B, D = x_flat.shape
    assert D == params["D"]
    td, d_pad = params["td"], params["d_pad"]
    cdt = params["compute_dtype"]
    w_p, h_p = params["w"], params["h"]

    tb = _round_up(min(int(tb), _round_up(B, 16)), 16)  # bf16 sublane rule
    b_pad = _round_up(B, tb)
    nblk = d_pad // td

    # Zero padding of x is exact (padded rows/cols contribute zero energy).
    x_p = jnp.pad(x_flat.astype(jnp.float32), ((0, b_pad - B), (0, d_pad - D)))
    # Lane-dense resident slab (nblk, b_pad, td): DMAed once per batch tile;
    # K and N chunks are cheap dynamic first-axis indexes inside the kernel.
    x_slab = x_p.reshape(b_pad, nblk, td).transpose(1, 0, 2).astype(cdt)
    beta_arr = jnp.asarray(beta, jnp.float32).reshape((1,))

    grid = (b_pad // tb, nblk, nblk)   # (batch, N, K); K last = reduction.

    out = pl.pallas_call(
        _potts_kernel,
        out_shape=jax.ShapeDtypeStruct((b_pad, d_pad), jnp.float32),
        grid=grid,
        in_specs=[
            pl.BlockSpec(memory_space=pltpu.MemorySpace.SMEM),        # beta
            pl.BlockSpec((nblk, tb, td), lambda b, n, k: (0, b, 0)),  # x slab
            pl.BlockSpec((td, td), lambda b, n, k: (k, n)),           # W tile
            pl.BlockSpec((1, td), lambda b, n, k: (0, n)),            # h tile
        ],
        out_specs=pl.BlockSpec((tb, td), lambda b, n, k: (b, n)),
        compiler_params=pltpu.CompilerParams(
            dimension_semantics=("parallel", "parallel", "arbitrary"),
            vmem_limit_bytes=vmem_limit_bytes),
    )(beta_arr, x_slab, w_p, h_p)

    # Lane-dense (B_pad, D_pad) partial-energy slab -> per-sample scalar energy
    # (tiny XLA reduce; keeps the kernel free of cross-lane reductions).
    return jnp.sum(out, axis=1)[:B]


# ----------------------------------------------------------------------------
# Plain-JAX glue (mirrors Potts.__init__ + Symmetric) and a reference forward.
# ----------------------------------------------------------------------------
def symmetric_parametrization(raw_w, L, A):
    """JAX port of Symmetric.forward: (triu(W) + triu(W,1).T) * block-offdiag-mask."""
    D = L * A
    mask_LL = jnp.ones((L, L), jnp.float32) - jnp.eye(L, dtype=jnp.float32)
    mask = jnp.ones((L, L, A, A), jnp.float32) * mask_LL[:, :, None, None]
    mask = mask.transpose(0, 2, 1, 3).reshape(D, D)
    sym = jnp.triu(raw_w) + jnp.triu(raw_w, 1).T
    return sym * mask


def jax_reference_forward(x_flat, w_eff, h, beta=1.0):
    y = x_flat @ w_eff.T          # exact nn.Linear semantics
    return jnp.sum(x_flat * (y * beta / 2.0 + h), axis=1)


if __name__ == "__main__":
    # Small shapes consistent with the module: batch=2, L=8 positions, A=4 states.
    B, L, A = 2, 8, 4
    D = L * A

    key = jax.random.PRNGKey(0)
    kx, kw, kh = jax.random.split(key, 3)

    # Module inits to zero; use random values so the kernel does real work,
    # then apply the Symmetric parametrization exactly as the module would.
    raw_w = jax.random.normal(kw, (D, D), jnp.float32) * 0.1
    w_eff = symmetric_parametrization(raw_w, L, A)
    h = jax.random.normal(kh, (D,), jnp.float32) * 0.1

    # Input: one-hot sequences (B, L, A), flattened like torch.flatten(X, 1, 2).
    idx = jax.random.randint(kx, (B, L), 0, A)
    X = jax.nn.one_hot(idx, A, dtype=jnp.float32)
    x_flat = X.reshape(B, D)

    beta = 1.0

    # --- bf16 MXU path (default) ---------------------------------------------
    params_bf16 = prepare_potts_params(w_eff, h)              # one-time pad/cast
    out = jax.block_until_ready(potts_energy(x_flat, params_bf16, beta=beta))
    assert out.shape == (B,)

    ref_f32 = jax_reference_forward(x_flat, w_eff, h, beta=beta)
    # Tight check against the bf16-quantized weight (one-hot x is bf16-exact).
    w_bf16 = w_eff.astype(jnp.bfloat16).astype(jnp.float32)
    ref_bf16 = jax_reference_forward(x_flat, w_bf16, h, beta=beta)
    assert jnp.allclose(out, ref_bf16, atol=1e-4, rtol=1e-4), (out, ref_bf16)
    # Loose sanity check against the f32 reference (bf16 W quantization error).
    assert jnp.allclose(out, ref_f32, atol=5e-2, rtol=5e-2), (out, ref_f32)

    # --- f32 path (exact) -----------------------------------------------------
    params_f32 = prepare_potts_params(w_eff, h, compute_dtype=jnp.float32)
    out_f32 = jax.block_until_ready(potts_energy(x_flat, params_f32, beta=beta))
    assert jnp.allclose(out_f32, ref_f32, atol=1e-5, rtol=1e-5), (out_f32, ref_f32)

    print("KERNEL_OK")
</pallas_src>

<mosaic_0001>
module attributes {stable_mosaic.version = 11 : i64} {
  func.func @_potts_kernel(%arg0: i32, %arg1: i32, %arg2: i32, %arg3: memref<1xf32, #tpu.memory_space<smem>>, %arg4: memref<1x16x128xbf16, #tpu.memory_space<vmem>>, %arg5: memref<128x128xbf16, #tpu.memory_space<vmem>>, %arg6: memref<1x128xf32, #tpu.memory_space<vmem>>, %arg7: memref<16x128xf32, #tpu.memory_space<vmem>>) attributes {dimension_semantics = [#tpu.dimension_semantics<parallel>, #tpu.dimension_semantics<parallel>, #tpu.dimension_semantics<arbitrary>], iteration_bounds = array<i64: 1, 1, 1>, scalar_prefetch = 0 : i64, scratch_operands = 0 : i64, tpu.core_type = #tpu.core_type<tc>, window_params = [{transform_indices = @transform_0, window_bounds = array<i64: 1>}, {transform_indices = @transform_1, window_bounds = array<i64: 1, 16, 128>}, {transform_indices = @transform_2, window_bounds = array<i64: 128, 128>}, {transform_indices = @transform_3, window_bounds = array<i64: 1, 128>}, {transform_indices = @transform_4, window_bounds = array<i64: 16, 128>}]} {
    %c0_i32 = arith.constant 0 : i32
    %0 = arith.cmpi eq, %arg2, %c0_i32 : i32
    %1 = arith.extui %0 : i1 to i32
    %c0_i32_0 = arith.constant 0 : i32
    %2 = arith.cmpi ne, %1, %c0_i32_0 : i32
    scf.if %2 {
      %cst_10 = arith.constant 0.000000e+00 : f32
      %14 = vector.broadcast %cst_10 : f32 to vector<16x128xf32>
      %c0_11 = arith.constant 0 : index
      %c0_12 = arith.constant 0 : index
      %15 = vector.load %arg7[%c0_11, %c0_12] : memref<16x128xf32, #tpu.memory_space<vmem>>, vector<16x128xf32>
      tpu.vector_store %arg7[%c0_11, %c0_12], %14 {strides = array<i32>} : memref<16x128xf32, #tpu.memory_space<vmem>>, vector<16x128xf32>,
    } else {
    }
    %c0 = arith.constant 0 : index
    %c0_1 = arith.constant 0 : index
    %3 = vector.load %arg7[%c0, %c0_1] : memref<16x128xf32, #tpu.memory_space<vmem>>, vector<16x128xf32>
    %4 = arith.index_cast %arg2 : i32 to index
    %c0_2 = arith.constant 0 : index
    %c0_3 = arith.constant 0 : index
    %5 = vector.load %arg4[%4, %c0_2, %c0_3] : memref<1x16x128xbf16, #tpu.memory_space<vmem>>, vector<1x16x128xbf16>
    %6 = vector.shape_cast %5 : vector<1x16x128xbf16> to vector<16x128xbf16>
    %c0_4 = arith.constant 0 : index
    %c0_5 = arith.constant 0 : index
    %7 = vector.load %arg5[%c0_4, %c0_5] : memref<128x128xbf16, #tpu.memory_space<vmem>>, vector<128x128xbf16>
    %cst = arith.constant dense<0.000000e+00> : vector<16x128xf32>
    %8 = tpu.matmul %6, %7, %cst {dimension_numbers = #tpu.dot_dimension_numbers<[1], [0], [0], [1], [0, 0, 1, 1], [], []>} : vector<16x128xbf16>, vector<128x128xbf16>, vector<16x128xf32> -> vector<16x128xf32>
    %9 = arith.addf %3, %8 : vector<16x128xf32>
    %c0_6 = arith.constant 0 : index
    %c0_7 = arith.constant 0 : index
    %10 = vector.load %arg7[%c0_6, %c0_7] : memref<16x128xf32, #tpu.memory_space<vmem>>, vector<16x128xf32>
    tpu.vector_store %arg7[%c0_6, %c0_7], %9 {strides = array<i32>} : memref<16x128xf32, #tpu.memory_space<vmem>>, vector<16x128xf32>,
    %c0_i32_8 = arith.constant 0 : i32
    %11 = arith.cmpi eq, %arg2, %c0_i32_8 : i32
    %12 = arith.extui %11 : i1 to i32
    %c0_i32_9 = arith.constant 0 : i32
    %13 = arith.cmpi ne, %12, %c0_i32_9 : i32
    scf.if %13 {
      %c0_10 = arith.constant 0 : index
      %14 = memref.load %arg3[%c0_10] : memref<1xf32, #tpu.memory_space<smem>>
      %cst_11 = arith.constant 5.000000e-01 : f32
      %15 = arith.mulf %14, %cst_11 : f32
      %16 = arith.index_cast %arg1 : i32 to index
      %c0_12 = arith.constant 0 : index
      %c0_13 = arith.constant 0 : index
      %17 = vector.load %arg4[%16, %c0_12, %c0_13] : memref<1x16x128xbf16, #tpu.memory_space<vmem>>, vector<1x16x128xbf16>
      %18 = vector.shape_cast %17 : vector<1x16x128xbf16> to vector<16x128xbf16>
      %19 = arith.extf %18 : vector<16x128xbf16> to vector<16x128xf32>
      %c0_14 = arith.constant 0 : index
      %c0_15 = arith.constant 0 : index
      %20 = vector.load %arg7[%c0_14, %c0_15] : memref<16x128xf32, #tpu.memory_space<vmem>>, vector<16x128xf32>
      %21 = vector.broadcast %15 : f32 to vector<16x128xf32>
      %22 = arith.mulf %20, %21 : vector<16x128xf32>
      %c0_16 = arith.constant 0 : index
      %c0_17 = arith.constant 0 : index
      %23 = vector.load %arg6[%c0_16, %c0_17] : memref<1x128xf32, #tpu.memory_space<vmem>>, vector<1x128xf32>
      %24 = vector.broadcast %23 : vector<1x128xf32> to vector<16x128xf32>
      %25 = arith.addf %22, %24 : vector<16x128xf32>
      %26 = arith.mulf %19, %25 : vector<16x128xf32>
      %c0_18 = arith.constant 0 : index
      %c0_19 = arith.constant 0 : index
      %27 = vector.load %arg7[%c0_18, %c0_19] : memref<16x128xf32, #tpu.memory_space<vmem>>, vector<16x128xf32>
      tpu.vector_store %arg7[%c0_18, %c0_19], %26 {strides = array<i32>} : memref<16x128xf32, #tpu.memory_space<vmem>>, vector<16x128xf32>,
    } else {
    }
    return
  }
  func.func @transform_0(%arg0: i32, %arg1: i32, %arg2: i32) -> i32 {
    %c0_i32 = arith.constant 0 : i32
    %c0_i32_0 = arith.constant 0 : i32
    return %c0_i32 : i32
  }
  func.func @transform_1(%arg0: i32, %arg1: i32, %arg2: i32) -> (i32, i32, i32) {
    %c0_i32 = arith.constant 0 : i32
    %c0_i32_0 = arith.constant 0 : i32
    %c0_i32_1 = arith.constant 0 : i32
    return %c0_i32, %arg0, %c0_i32_0 : i32, i32, i32
  }
  func.func @transform_2(%arg0: i32, %arg1: i32, %arg2: i32) -> (i32, i32) {
    %c0_i32 = arith.constant 0 : i32
    return %arg2, %arg1 : i32, i32
  }
  func.func @transform_3(%arg0: i32, %arg1: i32, %arg2: i32) -> (i32, i32) {
    %c0_i32 = arith.constant 0 : i32
    %c0_i32_0 = arith.constant 0 : i32
    return %c0_i32, %arg1 : i32, i32
  }
  func.func @transform_4(%arg0: i32, %arg1: i32, %arg2: i32) -> (i32, i32) {
    %c0_i32 = arith.constant 0 : i32
    return %arg0, %arg1 : i32, i32
  }
}

</mosaic_0001>

<llo_original>
// kernel: tpu_custom_call.1
$region0: #{tpu_custom_call.1}
  #allocation0 [shape = 'u32[]', space=smem, size = 0x4, offset = 0x4, fixed_abs, tag = 'smem constant byte address 0x4 - core index']
  #allocation1 [shape = 'u32[144,128]{1,0:T(1,128)}', space=vmem, size = 0x12000, scoped, tag = 'internal scratch']
  #allocation2 [shape = 'f32[1]{0:T(128)S(6)}', space=smem, size = 0x200, scoped, tag = 'scoped memory for tpu_custom_call.1']
  %s0 = inlined_call_operand.<no memory space> [shape: f32[1], index: 0, kind: input, shape index: {}]
  %s1 = inlined_call_operand.hbm [shape: bf16[1,16,128], index: 1, kind: input, shape index: {}]
  %s2 = inlined_call_operand.hbm [shape: bf16[128,128], index: 2, kind: input, shape index: {}]
  %s3 = inlined_call_operand.vmem [shape: f32[1,128], index: 3, kind: input, shape index: {}]
  %s4 = inlined_call_operand.hbm [shape: f32[16,128], index: 4, kind: output, shape index: {}]
  %s5 = sld [smem:[#allocation0]]
  $region42: #{tpu_custom_call.1} parent=0
    _
  %s7 = ssub.s32 1, %s5
  %s8 = scalar_select 0, %s7, %s5
  %9 = sst [smem:[#allocation2]] %s0
  $region1: #{tpu_custom_call.1} parent=0
    #allocation3 [shape = 'u8[4096]{0}', space=vmem, size = 0x1000, scoped, tag = 'input window, operand 1, single buffered']
    #allocation4 [shape = 's32[1]{0}', space=sflag, size = 0x4, scoped, tag = 'scoped memory for tpu_custom_call.1']
    #allocation5 [shape = 's32[1]{0}', space=sflag, size = 0x4, scoped, tag = 'scoped memory for tpu_custom_call.1']
    #allocation6 [shape = 'u8[32768]{0}', space=vmem, size = 0x8000, scoped, tag = 'input window, operand 2, single buffered']
    #allocation7 [shape = 's32[1]{0}', space=sflag, size = 0x4, scoped, tag = 'scoped memory for tpu_custom_call.1']
    #allocation8 [shape = 'u8[8192]{0}', space=vmem, size = 0x2000, scoped, tag = 'output window, operand 0, single buffered']
    %10 = vsyncpa [#allocation4], 0
    %11 = vsyncpa [#allocation7], 0
    %12 = vsyncpa [#allocation5], 0
    // Predicated region
    $region2: #{tpu_custom_call.1} parent=1 // pred_check
      _
    $region3: #{tpu_custom_call.1} parent=1 // pred_check_branch
      %14 = sbr.rel (0) target = $region5
    $region4: #{tpu_custom_call.1} parent=1 // pred_region
      _
    $region5: #{tpu_custom_call.1} parent=1 // pred_fallthru
      _
    // Predicated region
    $region6: #{tpu_custom_call.1} parent=1 // pred_check
      _
    $region7: #{tpu_custom_call.1} parent=1 // pred_check_branch
      %16 = sbr.rel (0) target = $region9
    $region8: #{tpu_custom_call.1} parent=1 // pred_region
      %s18 = ssub.s32 128, 128
      %19 = vsyncadd [#allocation4], %s18
      %s20 = sshll.u32 [#allocation3], 4
      %s21 = int_to_ptr.vmem [resolvable:$true] %s20
      %26 = dma.hbm_to_vmem [thread:$0]  %s1, 128, %s21, [#allocation4], 64, 64, 4
    $region9: #{tpu_custom_call.1} parent=1 // pred_fallthru
      _
    // Predicated region
    $region10: #{tpu_custom_call.1} parent=1 // pred_check
      _
    $region11: #{tpu_custom_call.1} parent=1 // pred_check_branch
      %28 = sbr.rel (0) target = $region13
    $region12: #{tpu_custom_call.1} parent=1 // pred_region
      %s30 = ssub.s32 1024, 1024
      %31 = vsyncadd [#allocation7], %s30
      %s32 = sshll.u32 [#allocation6], 4
      %s33 = int_to_ptr.vmem [resolvable:$true] %s32
      %38 = dma.hbm_to_vmem [thread:$0]  %s2, 1024, %s33, [#allocation7], 64, 64, 4
    $region13: #{tpu_custom_call.1} parent=1 // pred_fallthru
      _
    // Predicated region
    $region14: #{tpu_custom_call.1} parent=1 // pred_check
      _
    $region15: #{tpu_custom_call.1} parent=1 // pred_check_branch
      %40 = sbr.rel (0) target = $region17
    $region16: #{tpu_custom_call.1} parent=1 // pred_region
      _
    $region17: #{tpu_custom_call.1} parent=1 // pred_fallthru
      _
    // Predicated region
    $region18: #{tpu_custom_call.1} parent=1 // pred_check
      _
    $region19: #{tpu_custom_call.1} parent=1 // pred_check_branch
      %42 = sbr.rel (0) target = $region21
    $region20: #{tpu_custom_call.1} parent=1 // pred_region
      %43 = dma.done [#allocation4], 128
    $region21: #{tpu_custom_call.1} parent=1 // pred_fallthru
      _
    // Predicated region
    $region22: #{tpu_custom_call.1} parent=1 // pred_check
      _
    $region23: #{tpu_custom_call.1} parent=1 // pred_check_branch
      %45 = sbr.rel (0) target = $region25
    $region24: #{tpu_custom_call.1} parent=1 // pred_region
      %46 = dma.done [#allocation7], 1024
    $region25: #{tpu_custom_call.1} parent=1 // pred_fallthru
      _
    %p48 = scmp.eq.s32.totalorder 0, 0
    // Predicated region
    $region26: #{tpu_custom_call.1} parent=1 // pred_check
      %p49 = pneg %p48
    $region27: #{tpu_custom_call.1} parent=1 // pred_check_branch
      %51 = sbr.rel (%p49) target = $region29
    $region28: #{tpu_custom_call.1} parent=1 // pred_region
      %52 = vst [vmem:[#allocation8] sm:$0xff] 0.0
      %53 = vst [vmem:[#allocation8 + $0x8] sm:$0xff] 0.0
    $region29: #{tpu_custom_call.1} parent=1 // pred_fallthru
      _
    %v54 = vld [vmem:[#allocation8] sm:$0xff]
    %v55 = vld [vmem:[#allocation8 + $0x8] sm:$0xff]
    %s56 = smul.u32 0, 2
    %s57 = smul.addr %s56, 4
    %s58 = scalar_lea.vmem [#allocation3], %s57
    %v59 = vld [vmem:[%s58] sm:$0xf]
    %v60 = vld [vmem:[%s58 + $0x4] sm:$0xf]
    %v61 = vld [vmem:[#allocation6] sm:$0xf]
    %v62 = vld [vmem:[#allocation6 + $0x4] sm:$0xf]
    %v63 = vld [vmem:[#allocation6 + $0x8] sm:$0xf]
    %v64 = vld [vmem:[#allocation6 + $0xc] sm:$0xf]
    %v65 = vld [vmem:[#allocation6 + $0x10] sm:$0xf]
    %v66 = vld [vmem:[#allocation6 + $0x14] sm:$0xf]
    %v67 = vld [vmem:[#allocation6 + $0x18] sm:$0xf]
    %v68 = vld [vmem:[#allocation6 + $0x1c] sm:$0xf]
    %v69 = vld [vmem:[#allocation6 + $0x20] sm:$0xf]
    %v70 = vld [vmem:[#allocation6 + $0x24] sm:$0xf]
    %v71 = vld [vmem:[#allocation6 + $0x28] sm:$0xf]
    %v72 = vld [vmem:[#allocation6 + $0x2c] sm:$0xf]
    %v73 = vld [vmem:[#allocation6 + $0x30] sm:$0xf]
    %v74 = vld [vmem:[#allocation6 + $0x34] sm:$0xf]
    %v75 = vld [vmem:[#allocation6 + $0x38] sm:$0xf]
    %v76 = vld [vmem:[#allocation6 + $0x3c] sm:$0xf]
    %v79 = vunpack.c.l.b16 %v59
    %v80 = vunpack.c.l.b16 %v60
    %v81 = vpack.c.b16 %v80, %v79
    %v99 = vunpack.c.l.b16 %v61
    %v100 = vunpack.c.l.b16 %v62
    %v101 = vunpack.c.l.b16 %v63
    %v102 = vunpack.c.l.b16 %v64
    %v103 = vunpack.c.l.b16 %v65
    %v104 = vunpack.c.l.b16 %v66
    %v105 = vunpack.c.l.b16 %v67
    %v106 = vunpack.c.l.b16 %v68
    %v107 = vunpack.c.l.b16 %v69
    %v108 = vunpack.c.l.b16 %v70
    %v109 = vunpack.c.l.b16 %v71
    %v110 = vunpack.c.l.b16 %v72
    %v111 = vunpack.c.l.b16 %v73
    %v112 = vunpack.c.l.b16 %v74
    %v113 = vunpack.c.l.b16 %v75
    %v114 = vunpack.c.l.b16 %v76
    %v115 = vpack.c.b16 %v100, %v99
    %v116 = vpack.c.b16 %v102, %v101
    %v117 = vpack.c.b16 %v104, %v103
    %v118 = vpack.c.b16 %v106, %v105
    %v119 = vpack.c.b16 %v108, %v107
    %v120 = vpack.c.b16 %v110, %v109
    %v121 = vpack.c.b16 %v112, %v111
    %v122 = vpack.c.b16 %v114, %v113
    %131 = vmatprep.subr.bf16.mxu0 0
    %132 = vmatpush1.bf16.msra.mxu0 %v122
    %133 = vmatprep.subr.bf16.mxu0 0
    %134 = vmatpush1.bf16.msra.mxu0 %v121
    %135 = vmatprep.subr.bf16.mxu0 0
    %136 = vmatpush1.bf16.msra.mxu0 %v120
    %137 = vmatprep.subr.bf16.mxu0 0
    %138 = vmatpush1.bf16.msra.mxu0 %v119
    %139 = vmatprep.subr.bf16.mxu0 0
    %140 = vmatpush1.bf16.msra.mxu0 %v118
    %141 = vmatprep.subr.bf16.mxu0 0
    %142 = vmatpush1.bf16.msra.mxu0 %v117
    %143 = vmatprep.subr.bf16.mxu0 0
    %144 = vmatpush1.bf16.msra.mxu0 %v116
    %145 = vmatprep.subr.bf16.mxu0 0
    %146 = vmatpush1.bf16.msra.mxu0 %v115
    %147 = vmatprep.subr.bf16.mxu0 0
    %148 = vmatpush2.bf16.msra.mxu0 0
    %149 = vmatprep.subr.bf16.mxu0 0
    %150 = vmatpush2.bf16.msra.mxu0 0
    %151 = vmatprep.subr.bf16.mxu0 0
    %152 = vmatpush2.bf16.msra.mxu0 0
    %153 = vmatprep.subr.bf16.mxu0 0
    %154 = vmatpush2.bf16.msra.mxu0 0
    %155 = vmatprep.subr.bf16.mxu0 0
    %156 = vmatpush2.bf16.msra.mxu0 0
    %157 = vmatprep.subr.bf16.mxu0 0
    %158 = vmatpush2.bf16.msra.mxu0 0
    %159 = vmatprep.subr.bf16.mxu0 0
    %160 = vmatpush2.bf16.msra.mxu0 0
    %161 = vmatprep.subr.bf16.mxu0 0
    %162 = vmatpush2.bf16.msra.mxu0 0
    %163 = vmatprep.mubr.bf16.mxu0 0
    %164 = vmatmul.mubr.bf16.gmra.mxu0 %v81
    %v165 = vpop.f32.mrf.mxu0
    %v166 = vadd.f32 0.0, %v165
    %v167 = vpop.f32.mrf.mxu0
    %v168 = vpop.f32.mrf.mxu0
    %v169 = vadd.f32 0.0, %v168
    %v170 = vpop.f32.mrf.mxu0
    %171 = vdwg.mxu0
    %v172 = vadd.f32 %v54, %v166
    %v173 = vadd.f32 %v55, %v169
    %174 = vst [vmem:[#allocation8] sm:$0xff] %v172
    %175 = vst [vmem:[#allocation8 + $0x8] sm:$0xff] %v173
    // Predicated region
    $region30: #{tpu_custom_call.1} parent=1 // pred_check
      %p176 = pneg %p48
    $region31: #{tpu_custom_call.1} parent=1 // pred_check_branch
      %178 = sbr.rel (%p176) target = $region33
    $region32: #{tpu_custom_call.1} parent=1 // pred_region
      %s179 = sld [smem:[#allocation2]]
      %s180 = smul.f32 %s179, 0.5
      %s181 = smul.u32 0, 2
      %s182 = smul.addr %s181, 4
      %s183 = scalar_lea.vmem [#allocation3], %s182
      %v184 = vld [vmem:[%s183] sm:$0xf]
      %v185 = vld [vmem:[%s183 + $0x4] sm:$0xf]
      %v186 = vunpack.c.l.bf16 %v184
      %v187 = vunpack.c.l.bf16 %v185
      %v188 = vld [vmem:[#allocation8] sm:$0xff]
      %v189 = vld [vmem:[#allocation8 + $0x8] sm:$0xff]
      %v190 = vstv %s180
      %v191 = vmul.f32 %v188, %v190
      %v192 = vmul.f32 %v189, %v190
      %v193 = vld [vmem:[%s3] sm:$0x1]
      %v195 = vlaneseq
      %v196 = vshrl.u32 %v195, 7
      %v197 = vsub.s32 0, %v196
      %v198 = vrot.slane %v193, %v197
      %v200 = vadd.f32 %v191, %v198
      %v201 = vadd.f32 %v192, %v198
      %v202 = vmul.f32 %v186, %v200
      %v203 = vmul.f32 %v187, %v201
      %204 = vst [vmem:[#allocation8] sm:$0xff] %v202
      %205 = vst [vmem:[#allocation8 + $0x8] sm:$0xff] %v203
    $region33: #{tpu_custom_call.1} parent=1 // pred_fallthru
      _
    // Predicated region
    $region34: #{tpu_custom_call.1} parent=1 // pred_check
      _
    $region35: #{tpu_custom_call.1} parent=1 // pred_check_branch
      %207 = sbr.rel (0) target = $region37
    $region36: #{tpu_custom_call.1} parent=1 // pred_region
      %s209 = ssub.s32 256, 256
      %210 = vsyncadd [#allocation5], %s209
      %s211 = sshll.u32 [#allocation8], 4
      %s212 = int_to_ptr.vmem [resolvable:$true] %s211
      %217 = dma.vmem_to_hbm [thread:$0]  %s212, 256, %s4, [#allocation5], 128, 128, 8
    $region37: #{tpu_custom_call.1} parent=1 // pred_fallthru
      _
    // Predicated region
    $region38: #{tpu_custom_call.1} parent=1 // pred_check
      _
    $region39: #{tpu_custom_call.1} parent=1 // pred_check_branch
      %219 = sbr.rel (0) target = $region41
    $region40: #{tpu_custom_call.1} parent=1 // pred_region
      %220 = dma.done [#allocation5], 256
    $region41: #{tpu_custom_call.1} parent=1 // pred_fallthru
      _
    %221 = vsyncpa [#allocation4], 1
    %222 = vsyncpa [#allocation7], 1
    %223 = vsyncpa [#allocation5], 1

</llo_original>
